<compile_context>
chip_gen: v7x
topology: tpu7x:2x2x1
jax: 0.10.0
libtpu: 0.0.40
codegen_flags: <defaults>
</compile_context>

<pallas_src>
import functools

import jax
import jax.numpy as jnp
from jax import lax
from jax.experimental import pallas as pl
from jax.experimental.pallas import tpu as pltpu


def _round_up(x, m):
    return ((x + m - 1) // m) * m


def _rbf_tile_kernel(x1a_ref, x2at_ref, o_ref):
    # x1a_ref : (tm, d+2)  scaled-augmented x1 rows  [x1c, -0.5*|x1c|^2, -0.5]
    # x2at_ref: (d+2, tn)  augmented x2, pre-transposed  [x2c; 1; |x2c|^2]
    # o_ref   : (tm, tn)   exp(min(x1a @ x2at, 0)) == exp(-0.5 * clamp(sq, 0))
    s = lax.dot_general(
        x1a_ref[...], x2at_ref[...],
        dimension_numbers=(((1,), (0,)), ((), ())),
        preferred_element_type=jnp.float32,
    )                                               # (tm, tn) on the MXU
    # clamp_min_(0) on sq  <=>  min(-0.5*sq, 0) here; exp goes to the EUP.
    o_ref[...] = jnp.exp(jnp.minimum(s, 0.0)).astype(o_ref.dtype)


@functools.partial(jax.jit, static_argnames=("tm", "tn"))
def _rbf_pallas(x1_aug, x2_aug_t, *, tm, tn):
    n1p, daug = x1_aug.shape
    _, n2p = x2_aug_t.shape
    # Grid via cdiv: edge blocks are partial (masked stores) rather than
    # forcing round-up-to-tile padding of the HBM-written output.
    grid = (pl.cdiv(n1p, tm), pl.cdiv(n2p, tn))
    cost = pl.CostEstimate(
        flops=2 * daug * n1p * n2p,
        transcendentals=n1p * n2p,
        bytes_accessed=4 * (n1p * n2p + n1p * daug + daug * n2p),
    )
    return pl.pallas_call(
        _rbf_tile_kernel,
        out_shape=jax.ShapeDtypeStruct((n1p, n2p), jnp.float32),
        grid_spec=pltpu.PrefetchScalarGridSpec(
            num_scalar_prefetch=0,
            grid=grid,
            in_specs=[
                pl.BlockSpec((tm, daug), lambda i, j: (i, 0)),
                pl.BlockSpec((daug, tn), lambda i, j: (0, j)),
            ],
            out_specs=pl.BlockSpec((tm, tn), lambda i, j: (i, j)),
        ),
        compiler_params=pltpu.CompilerParams(
            dimension_semantics=("parallel", "parallel"),
            # 2 x (tm*tn*4) double-buffered output + tiny input tiles; 48 MiB
            # fits v7x's 64 MiB VMEM and is ample on v5e/v6e (128 MiB).
            vmem_limit_bytes=48 * 1024 * 1024,
        ),
        cost_estimate=cost,
    )(x1_aug, x2_aug_t)


class RBFMultipleLS:
    """JAX/Pallas port of RBF_multiple_ls."""

    def __init__(self, d=10):
        self.d = d
        self.ls = jnp.ones((d,), dtype=jnp.float32)   # register_buffer('ls', ones(d))

    def set_lengthscale(self, ls):
        ls = jnp.asarray(ls, dtype=jnp.float32)
        if ls.size == 1:
            self.ls = ls.reshape(()) * jnp.ones((self.d,), dtype=jnp.float32)
        else:
            assert ls.size == self.d
            self.ls = ls.reshape((self.d,))

    def __call__(self, x1, x2=None, mask=None, tm=1024, tn=2048):
        ls = self.ls if mask is None else self.ls[mask]
        x1s = jnp.asarray(x1, dtype=jnp.float32) / ls
        x2s = x1s if x2 is None else (jnp.asarray(x2, dtype=jnp.float32) / ls)

        # Centering (matches sq_dist's adjustment = x1.mean(-2, keepdim=True)).
        adjustment = jnp.mean(x1s, axis=-2, keepdims=True)
        x1c = x1s - adjustment
        x2c = x2s - adjustment

        # Augmented-matrix formulation with the -0.5 folded into the LHS
        # (O(N*d) wrapper work; removes a per-element multiply from the
        # O(N1*N2) hot loop):
        #   (-0.5) * sq = x1_aug @ x2_aug^T  with
        #   x1_aug = [x1c, -0.5*|x1c|^2, -0.5],  x2_aug = [x2c, 1, |x2c|^2]
        x1_norm = jnp.sum(x1c * x1c, axis=-1, keepdims=True)
        x2_norm = jnp.sum(x2c * x2c, axis=-1, keepdims=True)
        x1_aug = jnp.concatenate(
            [x1c, -0.5 * x1_norm, jnp.full_like(x1_norm, -0.5)], axis=-1)
        x2_aug_t = jnp.concatenate(
            [x2c, jnp.ones_like(x2_norm), x2_norm], axis=-1).T   # (d+2, N2)

        n1 = x1c.shape[0]
        n2 = x2c.shape[0]

        # Pad only to the (8, 128) layout grain (padded rows/cols are zeros ->
        # exp(0)=1, sliced off below).  Waste is bounded by <8 rows / <128 cols
        # regardless of tile size, instead of round-up-to-tile.
        n1p = _round_up(n1, 8)
        n2p = _round_up(n2, 128)
        if n1p != n1:
            x1_aug = jnp.pad(x1_aug, ((0, n1p - n1), (0, 0)))
        if n2p != n2:
            x2_aug_t = jnp.pad(x2_aug_t, ((0, 0), (0, n2p - n2)))

        # Lane-dense tiles: tm multiple of 8, tn multiple of 128, clipped to
        # the (padded) problem size so blocks never exceed the array.
        tm_eff = max(8, min(tm, n1p))
        tn_eff = max(128, min(tn, n2p))

        out = _rbf_pallas(x1_aug, x2_aug_t, tm=tm_eff, tn=tn_eff)
        return out[:n1, :n2]


def _reference(x1, x2, ls):
    """Pure-JAX reference mirroring the PyTorch code path."""
    x1 = x1 / ls
    x2 = x1 if x2 is None else x2 / ls
    adjustment = jnp.mean(x1, axis=-2, keepdims=True)
    x1 = x1 - adjustment
    x2 = x2 - adjustment
    x1_norm = jnp.sum(x1 ** 2, axis=-1, keepdims=True)
    x2_norm = jnp.sum(x2 ** 2, axis=-1, keepdims=True)
    x1_ = jnp.concatenate([-2.0 * x1, x1_norm, jnp.ones_like(x1_norm)], axis=-1)
    x2_ = jnp.concatenate([x2, jnp.ones_like(x2_norm), x2_norm], axis=-1)
    res = x1_ @ x2_.T
    res = jnp.maximum(res, 0.0)
    return jnp.exp(-0.5 * res)


if __name__ == "__main__":
    d = 10
    n1, n2 = 256, 128

    key = jax.random.PRNGKey(0)
    k1, k2, k3, k4, k5 = jax.random.split(key, 5)
    x1 = jax.random.normal(k1, (n1, d), dtype=jnp.float32)
    x2 = jax.random.normal(k2, (n2, d), dtype=jnp.float32)
    # Deterministic non-trivial lengthscales.
    ls = 0.5 + jax.random.uniform(k3, (d,), dtype=jnp.float32)

    kern = RBFMultipleLS(d=d)
    kern.set_lengthscale(ls)

    # Cross-covariance K(x1, x2).
    out = jax.block_until_ready(kern(x1, x2))
    # Self-covariance K(x1, x1) (x2 is None branch).
    out_self = jax.block_until_ready(kern(x1))

    ref = _reference(x1, x2, kern.ls)
    ref_self = _reference(x1, None, kern.ls)

    assert out.shape == (n1, n2)
    assert out_self.shape == (n1, n1)
    assert jnp.allclose(out, ref, atol=2e-5, rtol=1e-5)
    assert jnp.allclose(out_self, ref_self, atol=2e-5, rtol=1e-5)

    # Odd, non-(8,128)-aligned shapes exercise the padding + slice path.
    n1o, n2o = 100, 50
    x1o = jax.random.normal(k4, (n1o, d), dtype=jnp.float32)
    x2o = jax.random.normal(k5, (n2o, d), dtype=jnp.float32)
    out_odd = jax.block_until_ready(kern(x1o, x2o))
    ref_odd = _reference(x1o, x2o, kern.ls)
    assert out_odd.shape == (n1o, n2o)
    assert jnp.allclose(out_odd, ref_odd, atol=2e-5, rtol=1e-5)

    # Small explicit tiles force a cdiv grid with partial edge blocks
    # (masked stores) — exercises the new padding policy.
    out_part = jax.block_until_ready(kern(x1o, x2o, tm=64, tn=128))
    assert out_part.shape == (n1o, n2o)
    assert jnp.allclose(out_part, ref_odd, atol=2e-5, rtol=1e-5)

    # Lengthscale-mask branch (ls[mask] with reduced feature dim).
    mask = jnp.arange(d) < 6
    x1m = x1[:64, :6]
    x2m = x2[:32, :6]
    out_mask = jax.block_until_ready(kern(x1m, x2m, mask=mask))
    ref_mask = _reference(x1m, x2m, kern.ls[mask])
    assert out_mask.shape == (64, 32)
    assert jnp.allclose(out_mask, ref_mask, atol=2e-5, rtol=1e-5)

    print("KERNEL_OK")
</pallas_src>

<mosaic_0001>
module attributes {stable_mosaic.version = 11 : i64} {
  func.func @_rbf_tile_kernel(%arg0: i32, %arg1: i32, %arg2: memref<256x12xf32, #tpu.memory_space<vmem>>, %arg3: memref<12x128xf32, #tpu.memory_space<vmem>>, %arg4: memref<256x128xf32, #tpu.memory_space<vmem>>) attributes {dimension_semantics = [#tpu.dimension_semantics<parallel>, #tpu.dimension_semantics<parallel>], iteration_bounds = array<i64: 1, 1>, scalar_prefetch = 0 : i64, scratch_operands = 0 : i64, tpu.core_type = #tpu.core_type<tc>, window_params = [{transform_indices = @transform_0, window_bounds = array<i64: 256, 12>}, {transform_indices = @transform_1, window_bounds = array<i64: 12, 128>}, {transform_indices = @transform_2, window_bounds = array<i64: 256, 128>}]} {
    %c0 = arith.constant 0 : index
    %c0_0 = arith.constant 0 : index
    %0 = vector.load %arg2[%c0, %c0_0] : memref<256x12xf32, #tpu.memory_space<vmem>>, vector<256x12xf32>
    %c0_1 = arith.constant 0 : index
    %c0_2 = arith.constant 0 : index
    %1 = vector.load %arg3[%c0_1, %c0_2] : memref<12x128xf32, #tpu.memory_space<vmem>>, vector<12x128xf32>
    %cst = arith.constant dense<0.000000e+00> : vector<256x128xf32>
    %2 = tpu.matmul %0, %1, %cst {dimension_numbers = #tpu.dot_dimension_numbers<[1], [0], [0], [1], [0, 0, 1, 1], [], []>} : vector<256x12xf32>, vector<12x128xf32>, vector<256x128xf32> -> vector<256x128xf32>
    %cst_3 = arith.constant 0.000000e+00 : f32
    %3 = vector.broadcast %cst_3 : f32 to vector<256x128xf32>
    %4 = arith.minimumf %2, %3 : vector<256x128xf32>
    %5 = math.exp %4 : vector<256x128xf32>
    %c0_4 = arith.constant 0 : index
    %c0_5 = arith.constant 0 : index
    %6 = vector.load %arg4[%c0_4, %c0_5] : memref<256x128xf32, #tpu.memory_space<vmem>>, vector<256x128xf32>
    tpu.vector_store %arg4[%c0_4, %c0_5], %5 {strides = array<i32>} : memref<256x128xf32, #tpu.memory_space<vmem>>, vector<256x128xf32>,
    return
  }
  func.func @transform_0(%arg0: i32, %arg1: i32) -> (i32, i32) {
    %c0_i32 = arith.constant 0 : i32
    %c0_i32_0 = arith.constant 0 : i32
    return %arg0, %c0_i32 : i32, i32
  }
  func.func @transform_1(%arg0: i32, %arg1: i32) -> (i32, i32) {
    %c0_i32 = arith.constant 0 : i32
    %c0_i32_0 = arith.constant 0 : i32
    return %c0_i32, %arg1 : i32, i32
  }
  func.func @transform_2(%arg0: i32, %arg1: i32) -> (i32, i32) {
    %c0_i32 = arith.constant 0 : i32
    return %arg0, %arg1 : i32, i32
  }
}

</mosaic_0001>

<llo_original>
// kernel: _rbf_pallas.1
$region0: #{_rbf_pallas.1}
  #allocation0 [shape = 'u32[]', space=smem, size = 0x4, offset = 0x4, fixed_abs, tag = 'smem constant byte address 0x4 - core index']
  #allocation1 [shape = 'u32[144,128]{1,0:T(1,128)}', space=vmem, size = 0x12000, scoped, tag = 'internal scratch']
  %s0 = inlined_call_operand.vmem [shape: f32[256,12], index: 0, kind: input, shape index: {}]
  %s1 = inlined_call_operand.vmem [shape: f32[12,128], index: 1, kind: input, shape index: {}]
  %s2 = inlined_call_operand.hbm [shape: f32[256,128], index: 2, kind: output, shape index: {}]
  %s3 = sld [smem:[#allocation0]]
  $region18: #{_rbf_pallas.1} parent=0
    _
  %s5 = ssub.s32 1, %s3
  %s6 = scalar_select 0, %s5, %s3
  $region1: #{_rbf_pallas.1} parent=0
    #allocation2 [shape = 'u8[131072]{0}', space=vmem, size = 0x20000, scoped, tag = 'output window, operand 0, single buffered']
    #allocation3 [shape = 's32[1]{0}', space=sflag, size = 0x4, scoped, tag = 'scoped memory for _rbf_pallas.1']
    %7 = vsyncpa [#allocation3], 0
    // Predicated region
    $region2: #{_rbf_pallas.1} parent=1 // pred_check
      _
    $region3: #{_rbf_pallas.1} parent=1 // pred_check_branch
      %9 = sbr.rel (0) target = $region5
    $region4: #{_rbf_pallas.1} parent=1 // pred_region
      _
    $region5: #{_rbf_pallas.1} parent=1 // pred_fallthru
      _
    // Predicated region
    $region6: #{_rbf_pallas.1} parent=1 // pred_check
      _
    $region7: #{_rbf_pallas.1} parent=1 // pred_check_branch
      %11 = sbr.rel (0) target = $region9
    $region8: #{_rbf_pallas.1} parent=1 // pred_region
      _
    $region9: #{_rbf_pallas.1} parent=1 // pred_fallthru
      _
    %v12 = vld [vmem:[%s0] sm:$0xff]
    %v13 = vld [vmem:[%s0 + $0x8] sm:$0xff]
    %v14 = vld [vmem:[%s0 + $0x10] sm:$0xff]
    %v15 = vld [vmem:[%s0 + $0x18] sm:$0xff]
    %v16 = vld [vmem:[%s0 + $0x20] sm:$0xff]
    %v17 = vld [vmem:[%s0 + $0x28] sm:$0xff]
    %v18 = vld [vmem:[%s0 + $0x30] sm:$0xff]
    %v19 = vld [vmem:[%s0 + $0x38] sm:$0xff]
    %v20 = vld [vmem:[%s0 + $0x40] sm:$0xff]
    %v21 = vld [vmem:[%s0 + $0x48] sm:$0xff]
    %v22 = vld [vmem:[%s0 + $0x50] sm:$0xff]
    %v23 = vld [vmem:[%s0 + $0x58] sm:$0xff]
    %v24 = vld [vmem:[%s0 + $0x60] sm:$0xff]
    %v25 = vld [vmem:[%s0 + $0x68] sm:$0xff]
    %v26 = vld [vmem:[%s0 + $0x70] sm:$0xff]
    %v27 = vld [vmem:[%s0 + $0x78] sm:$0xff]
    %v28 = vld [vmem:[%s0 + $0x80] sm:$0xff]
    %v29 = vld [vmem:[%s0 + $0x88] sm:$0xff]
    %v30 = vld [vmem:[%s0 + $0x90] sm:$0xff]
    %v31 = vld [vmem:[%s0 + $0x98] sm:$0xff]
    %v32 = vld [vmem:[%s0 + $0xa0] sm:$0xff]
    %v33 = vld [vmem:[%s0 + $0xa8] sm:$0xff]
    %v34 = vld [vmem:[%s0 + $0xb0] sm:$0xff]
    %v35 = vld [vmem:[%s0 + $0xb8] sm:$0xff]
    %v36 = vld [vmem:[%s0 + $0xc0] sm:$0xff]
    %v37 = vld [vmem:[%s0 + $0xc8] sm:$0xff]
    %v38 = vld [vmem:[%s0 + $0xd0] sm:$0xff]
    %v39 = vld [vmem:[%s0 + $0xd8] sm:$0xff]
    %v40 = vld [vmem:[%s0 + $0xe0] sm:$0xff]
    %v41 = vld [vmem:[%s0 + $0xe8] sm:$0xff]
    %v42 = vld [vmem:[%s0 + $0xf0] sm:$0xff]
    %v43 = vld [vmem:[%s0 + $0xf8] sm:$0xff]
    %v44 = vld [vmem:[%s1] sm:$0xff]
    %v45 = vld [vmem:[%s1 + $0x8] sm:$0xf]
    %vm46 = vcmask 97280
    %v48 = vsel %vm46, %v12, 0
    %v51 = vsel %vm46, %v13, 0
    %v54 = vsel %vm46, %v14, 0
    %v57 = vsel %vm46, %v15, 0
    %v60 = vsel %vm46, %v16, 0
    %v63 = vsel %vm46, %v17, 0
    %v66 = vsel %vm46, %v18, 0
    %v69 = vsel %vm46, %v19, 0
    %v72 = vsel %vm46, %v20, 0
    %v75 = vsel %vm46, %v21, 0
    %v78 = vsel %vm46, %v22, 0
    %v81 = vsel %vm46, %v23, 0
    %v84 = vsel %vm46, %v24, 0
    %v87 = vsel %vm46, %v25, 0
    %v90 = vsel %vm46, %v26, 0
    %v93 = vsel %vm46, %v27, 0
    %v96 = vsel %vm46, %v28, 0
    %v99 = vsel %vm46, %v29, 0
    %v102 = vsel %vm46, %v30, 0
    %v105 = vsel %vm46, %v31, 0
    %v108 = vsel %vm46, %v32, 0
    %v111 = vsel %vm46, %v33, 0
    %v114 = vsel %vm46, %v34, 0
    %v117 = vsel %vm46, %v35, 0
    %v120 = vsel %vm46, %v36, 0
    %v123 = vsel %vm46, %v37, 0
    %v126 = vsel %vm46, %v38, 0
    %v129 = vsel %vm46, %v39, 0
    %v132 = vsel %vm46, %v40, 0
    %v135 = vsel %vm46, %v41, 0
    %v138 = vsel %vm46, %v42, 0
    %v141 = vsel %vm46, %v43, 0
    %vm143 = vcmask 1043456
    %v145 = vsel %vm143, %v45, 0
    %147 = vmatprep.subr.mxu0 0.0
    %148 = vmatpush1.msra.mxu0 %v44
    %149 = vmatprep.subr.mxu0 0.0
    %150 = vmatpush1.msra.mxu0 %v145
    %151 = vmatprep.subr.mxu0 0.0
    %152 = vmatpush1.msra.mxu0 0.0
    %153 = vmatprep.subr.mxu0 0.0
    %154 = vmatpush1.msra.mxu0 0.0
    %155 = vmatprep.subr.mxu0 0.0
    %156 = vmatpush1.msra.mxu0 0.0
    %157 = vmatprep.subr.mxu0 0.0
    %158 = vmatpush1.msra.mxu0 0.0
    %159 = vmatprep.subr.mxu0 0.0
    %160 = vmatpush1.msra.mxu0 0.0
    %161 = vmatprep.subr.mxu0 0.0
    %162 = vmatpush1.msra.mxu0 0.0
    %163 = vmatprep.subr.mxu0 0.0
    %164 = vmatpush1.msra.mxu0 0.0
    %165 = vmatprep.subr.mxu0 0.0
    %166 = vmatpush1.msra.mxu0 0.0
    %167 = vmatprep.subr.mxu0 0.0
    %168 = vmatpush1.msra.mxu0 0.0
    %169 = vmatprep.subr.mxu0 0.0
    %170 = vmatpush1.msra.mxu0 0.0
    %171 = vmatprep.subr.mxu0 0.0
    %172 = vmatpush1.msra.mxu0 0.0
    %173 = vmatprep.subr.mxu0 0.0
    %174 = vmatpush1.msra.mxu0 0.0
    %175 = vmatprep.subr.mxu0 0.0
    %176 = vmatpush1.msra.mxu0 0.0
    %177 = vmatprep.subr.mxu0 0.0
    %178 = vmatpush1.msra.mxu0 0.0
    %179 = vmatprep.subr.mxu0 0.0
    %180 = vmatpush1.msra.mxu0 0.0
    %181 = vmatprep.subr.mxu0 0.0
    %182 = vmatpush1.msra.mxu0 0.0
    %183 = vmatprep.subr.mxu0 0.0
    %184 = vmatpush1.msra.mxu0 0.0
    %185 = vmatprep.subr.mxu0 0.0
    %186 = vmatpush1.msra.mxu0 0.0
    %187 = vmatprep.subr.mxu0 0.0
    %188 = vmatpush1.msra.mxu0 0.0
    %189 = vmatprep.subr.mxu0 0.0
    %190 = vmatpush1.msra.mxu0 0.0
    %191 = vmatprep.subr.mxu0 0.0
    %192 = vmatpush1.msra.mxu0 0.0
    %193 = vmatprep.subr.mxu0 0.0
    %194 = vmatpush1.msra.mxu0 0.0
    %195 = vmatprep.subr.mxu0 0.0
    %196 = vmatpush1.msra.mxu0 0.0
    %197 = vmatprep.subr.mxu0 0.0
    %198 = vmatpush1.msra.mxu0 0.0
    %199 = vmatprep.subr.mxu0 0.0
    %200 = vmatpush1.msra.mxu0 0.0
    %201 = vmatprep.subr.mxu0 0.0
    %202 = vmatpush1.msra.mxu0 0.0
    %203 = vmatprep.subr.mxu0 0.0
    %204 = vmatpush1.msra.mxu0 0.0
    %205 = vmatprep.subr.mxu0 0.0
    %206 = vmatpush1.msra.mxu0 0.0
    %207 = vmatprep.subr.mxu0 0.0
    %208 = vmatpush1.msra.mxu0 0.0
    %209 = vmatprep.subr.mxu0 0.0
    %210 = vmatpush1.msra.mxu0 0.0
    %211 = vmatprep.mubr.f32.mxu0 0.0
    %212 = vmatmul.mubr.f32.gmra.mrb[0].mxu0 %v48
    %v213 = vpop.f32.mrb[0].mxu0
    %v214 = vadd.f32 0.0, %v213
    %v215 = vpop.f32.mrb[0].mxu0
    %216 = vmatprep.mubr.f32.mxu0 0.0
    %217 = vmatmul.mubr.f32.gmra.mrb[0].mxu0 %v51
    %v218 = vpop.f32.mrb[0].mxu0
    %v219 = vadd.f32 0.0, %v218
    %v220 = vpop.f32.mrb[0].mxu0
    %221 = vmatprep.mubr.f32.mxu0 0.0
    %222 = vmatmul.mubr.f32.gmra.mrb[0].mxu0 %v54
    %v223 = vpop.f32.mrb[0].mxu0
    %v224 = vadd.f32 0.0, %v223
    %v225 = vpop.f32.mrb[0].mxu0
    %226 = vmatprep.mubr.f32.mxu0 0.0
    %227 = vmatmul.mubr.f32.gmra.mrb[0].mxu0 %v57
    %v228 = vpop.f32.mrb[0].mxu0
    %v229 = vadd.f32 0.0, %v228
    %v230 = vpop.f32.mrb[0].mxu0
    %231 = vmatprep.mubr.f32.mxu0 0.0
    %232 = vmatmul.mubr.f32.gmra.mrb[0].mxu0 %v60
    %v233 = vpop.f32.mrb[0].mxu0
    %v234 = vadd.f32 0.0, %v233
    %v235 = vpop.f32.mrb[0].mxu0
    %236 = vmatprep.mubr.f32.mxu0 0.0
    %237 = vmatmul.mubr.f32.gmra.mrb[0].mxu0 %v63
    %v238 = vpop.f32.mrb[0].mxu0
    %v239 = vadd.f32 0.0, %v238
    %v240 = vpop.f32.mrb[0].mxu0
    %241 = vmatprep.mubr.f32.mxu0 0.0
    %242 = vmatmul.mubr.f32.gmra.mrb[0].mxu0 %v66
    %v243 = vpop.f32.mrb[0].mxu0
    %v244 = vadd.f32 0.0, %v243
    %v245 = vpop.f32.mrb[0].mxu0
    %246 = vmatprep.mubr.f32.mxu0 0.0
    %247 = vmatmul.mubr.f32.gmra.mrb[0].mxu0 %v69
    %v248 = vpop.f32.mrb[0].mxu0
    %v249 = vadd.f32 0.0, %v248
    %v250 = vpop.f32.mrb[0].mxu0
    %251 = vmatprep.mubr.f32.mxu0 0.0
    %252 = vmatmul.mubr.f32.gmra.mrb[0].mxu0 %v72
    %v253 = vpop.f32.mrb[0].mxu0
    %v254 = vadd.f32 0.0, %v253
    %v255 = vpop.f32.mrb[0].mxu0
    %256 = vmatprep.mubr.f32.mxu0 0.0
    %257 = vmatmul.mubr.f32.gmra.mrb[0].mxu0 %v75
    %v258 = vpop.f32.mrb[0].mxu0
    %v259 = vadd.f32 0.0, %v258
    %v260 = vpop.f32.mrb[0].mxu0
    %261 = vmatprep.mubr.f32.mxu0 0.0
    %262 = vmatmul.mubr.f32.gmra.mrb[0].mxu0 %v78
    %v263 = vpop.f32.mrb[0].mxu0
    %v264 = vadd.f32 0.0, %v263
    %v265 = vpop.f32.mrb[0].mxu0
    %266 = vmatprep.mubr.f32.mxu0 0.0
    %267 = vmatmul.mubr.f32.gmra.mrb[0].mxu0 %v81
    %v268 = vpop.f32.mrb[0].mxu0
    %v269 = vadd.f32 0.0, %v268
    %v270 = vpop.f32.mrb[0].mxu0
    %271 = vmatprep.mubr.f32.mxu0 0.0
    %272 = vmatmul.mubr.f32.gmra.mrb[0].mxu0 %v84
    %v273 = vpop.f32.mrb[0].mxu0
    %v274 = vadd.f32 0.0, %v273
    %v275 = vpop.f32.mrb[0].mxu0
    %276 = vmatprep.mubr.f32.mxu0 0.0
    %277 = vmatmul.mubr.f32.gmra.mrb[0].mxu0 %v87
    %v278 = vpop.f32.mrb[0].mxu0
    %v279 = vadd.f32 0.0, %v278
    %v280 = vpop.f32.mrb[0].mxu0
    %281 = vmatprep.mubr.f32.mxu0 0.0
    %282 = vmatmul.mubr.f32.gmra.mrb[0].mxu0 %v90
    %v283 = vpop.f32.mrb[0].mxu0
    %v284 = vadd.f32 0.0, %v283
    %v285 = vpop.f32.mrb[0].mxu0
    %286 = vmatprep.mubr.f32.mxu0 0.0
    %287 = vmatmul.mubr.f32.gmra.mrb[0].mxu0 %v93
    %v288 = vpop.f32.mrb[0].mxu0
    %v289 = vadd.f32 0.0, %v288
    %v290 = vpop.f32.mrb[0].mxu0
    %291 = vmatprep.mubr.f32.mxu0 0.0
    %292 = vmatmul.mubr.f32.gmra.mrb[0].mxu0 %v96
    %v293 = vpop.f32.mrb[0].mxu0
    %v294 = vadd.f32 0.0, %v293
    %v295 = vpop.f32.mrb[0].mxu0
    %296 = vmatprep.mubr.f32.mxu0 0.0
    %297 = vmatmul.mubr.f32.gmra.mrb[0].mxu0 %v99
    %v298 = vpop.f32.mrb[0].mxu0
    %v299 = vadd.f32 0.0, %v298
    %v300 = vpop.f32.mrb[0].mxu0
    %301 = vmatprep.mubr.f32.mxu0 0.0
    %302 = vmatmul.mubr.f32.gmra.mrb[0].mxu0 %v102
    %v303 = vpop.f32.mrb[0].mxu0
    %v304 = vadd.f32 0.0, %v303
    %v305 = vpop.f32.mrb[0].mxu0
    %306 = vmatprep.mubr.f32.mxu0 0.0
    %307 = vmatmul.mubr.f32.gmra.mrb[0].mxu0 %v105
    %v308 = vpop.f32.mrb[0].mxu0
    %v309 = vadd.f32 0.0, %v308
    %v310 = vpop.f32.mrb[0].mxu0
    %311 = vmatprep.mubr.f32.mxu0 0.0
    %312 = vmatmul.mubr.f32.gmra.mrb[0].mxu0 %v108
    %v313 = vpop.f32.mrb[0].mxu0
    %v314 = vadd.f32 0.0, %v313
    %v315 = vpop.f32.mrb[0].mxu0
    %316 = vmatprep.mubr.f32.mxu0 0.0
    %317 = vmatmul.mubr.f32.gmra.mrb[0].mxu0 %v111
    %v318 = vpop.f32.mrb[0].mxu0
    %v319 = vadd.f32 0.0, %v318
    %v320 = vpop.f32.mrb[0].mxu0
    %321 = vmatprep.mubr.f32.mxu0 0.0
    %322 = vmatmul.mubr.f32.gmra.mrb[0].mxu0 %v114
    %v323 = vpop.f32.mrb[0].mxu0
    %v324 = vadd.f32 0.0, %v323
    %v325 = vpop.f32.mrb[0].mxu0
    %326 = vmatprep.mubr.f32.mxu0 0.0
    %327 = vmatmul.mubr.f32.gmra.mrb[0].mxu0 %v117
    %v328 = vpop.f32.mrb[0].mxu0
    %v329 = vadd.f32 0.0, %v328
    %v330 = vpop.f32.mrb[0].mxu0
    %331 = vmatprep.mubr.f32.mxu0 0.0
    %332 = vmatmul.mubr.f32.gmra.mrb[0].mxu0 %v120
    %v333 = vpop.f32.mrb[0].mxu0
    %v334 = vadd.f32 0.0, %v333
    %v335 = vpop.f32.mrb[0].mxu0
    %336 = vmatprep.mubr.f32.mxu0 0.0
    %337 = vmatmul.mubr.f32.gmra.mrb[0].mxu0 %v123
    %v338 = vpop.f32.mrb[0].mxu0
    %v339 = vadd.f32 0.0, %v338
    %v340 = vpop.f32.mrb[0].mxu0
    %341 = vmatprep.mubr.f32.mxu0 0.0
    %342 = vmatmul.mubr.f32.gmra.mrb[0].mxu0 %v126
    %v343 = vpop.f32.mrb[0].mxu0
    %v344 = vadd.f32 0.0, %v343
    %v345 = vpop.f32.mrb[0].mxu0
    %346 = vmatprep.mubr.f32.mxu0 0.0
    %347 = vmatmul.mubr.f32.gmra.mrb[0].mxu0 %v129
    %v348 = vpop.f32.mrb[0].mxu0
    %v349 = vadd.f32 0.0, %v348
    %v350 = vpop.f32.mrb[0].mxu0
    %351 = vmatprep.mubr.f32.mxu0 0.0
    %352 = vmatmul.mubr.f32.gmra.mrb[0].mxu0 %v132
    %v353 = vpop.f32.mrb[0].mxu0
    %v354 = vadd.f32 0.0, %v353
    %v355 = vpop.f32.mrb[0].mxu0
    %356 = vmatprep.mubr.f32.mxu0 0.0
    %357 = vmatmul.mubr.f32.gmra.mrb[0].mxu0 %v135
    %v358 = vpop.f32.mrb[0].mxu0
    %v359 = vadd.f32 0.0, %v358
    %v360 = vpop.f32.mrb[0].mxu0
    %361 = vmatprep.mubr.f32.mxu0 0.0
    %362 = vmatmul.mubr.f32.gmra.mrb[0].mxu0 %v138
    %v363 = vpop.f32.mrb[0].mxu0
    %v364 = vadd.f32 0.0, %v363
    %v365 = vpop.f32.mrb[0].mxu0
    %366 = vmatprep.mubr.f32.mxu0 0.0
    %367 = vmatmul.mubr.f32.gmra.mrb[0].mxu0 %v141
    %v368 = vpop.f32.mrb[0].mxu0
    %v369 = vadd.f32 0.0, %v368
    %v370 = vpop.f32.mrb[0].mxu0
    %371 = vdwg.mxu0
    %v372 = vmin.f32 %v214, 0.0
    %v373 = vmin.f32 %v219, 0.0
    %v374 = vmin.f32 %v224, 0.0
    %v375 = vmin.f32 %v229, 0.0
    %v376 = vmin.f32 %v234, 0.0
    %v377 = vmin.f32 %v239, 0.0
    %v378 = vmin.f32 %v244, 0.0
    %v379 = vmin.f32 %v249, 0.0
    %v380 = vmin.f32 %v254, 0.0
    %v381 = vmin.f32 %v259, 0.0
    %v382 = vmin.f32 %v264, 0.0
    %v383 = vmin.f32 %v269, 0.0
    %v384 = vmin.f32 %v274, 0.0
    %v385 = vmin.f32 %v279, 0.0
    %v386 = vmin.f32 %v284, 0.0
    %v387 = vmin.f32 %v289, 0.0
    %v388 = vmin.f32 %v294, 0.0
    %v389 = vmin.f32 %v299, 0.0
    %v390 = vmin.f32 %v304, 0.0
    %v391 = vmin.f32 %v309, 0.0
    %v392 = vmin.f32 %v314, 0.0
    %v393 = vmin.f32 %v319, 0.0
    %v394 = vmin.f32 %v324, 0.0
    %v395 = vmin.f32 %v329, 0.0
    %v396 = vmin.f32 %v334, 0.0
    %v397 = vmin.f32 %v339, 0.0
    %v398 = vmin.f32 %v344, 0.0
    %v399 = vmin.f32 %v349, 0.0
    %v400 = vmin.f32 %v354, 0.0
    %v401 = vmin.f32 %v359, 0.0
    %v402 = vmin.f32 %v364, 0.0
    %v403 = vmin.f32 %v369, 0.0
    %v404 = vmul.f32 %v372, 1.442695
    %v405 = vpow.pop %v404
    %v406 = vmul.f32 %v373, 1.442695
    %v407 = vpow.pop %v406
    %v408 = vmul.f32 %v374, 1.442695
    %v409 = vpow.pop %v408
    %v410 = vmul.f32 %v375, 1.442695
    %v411 = vpow.pop %v410
    %v412 = vmul.f32 %v376, 1.442695
    %v413 = vpow.pop %v412
    %v414 = vmul.f32 %v377, 1.442695
    %v415 = vpow.pop %v414
    %v416 = vmul.f32 %v378, 1.442695
    %v417 = vpow.pop %v416
    %v418 = vmul.f32 %v379, 1.442695
    %v419 = vpow.pop %v418
    %v420 = vmul.f32 %v380, 1.442695
    %v421 = vpow.pop %v420
    %v422 = vmul.f32 %v381, 1.442695
    %v423 = vpow.pop %v422
    %v424 = vmul.f32 %v382, 1.442695
    %v425 = vpow.pop %v424
    %v426 = vmul.f32 %v383, 1.442695
    %v427 = vpow.pop %v426
    %v428 = vmul.f32 %v384, 1.442695
    %v429 = vpow.pop %v428
    %v430 = vmul.f32 %v385, 1.442695
    %v431 = vpow.pop %v430
    %v432 = vmul.f32 %v386, 1.442695
    %v433 = vpow.pop %v432
    %v434 = vmul.f32 %v387, 1.442695
    %v435 = vpow.pop %v434
    %v436 = vmul.f32 %v388, 1.442695
    %v437 = vpow.pop %v436
    %v438 = vmul.f32 %v389, 1.442695
    %v439 = vpow.pop %v438
    %v440 = vmul.f32 %v390, 1.442695
    %v441 = vpow.pop %v440
    %v442 = vmul.f32 %v391, 1.442695
    %v443 = vpow.pop %v442
    %v444 = vmul.f32 %v392, 1.442695
    %v445 = vpow.pop %v444
    %v446 = vmul.f32 %v393, 1.442695
    %v447 = vpow.pop %v446
    %v448 = vmul.f32 %v394, 1.442695
    %v449 = vpow.pop %v448
    %v450 = vmul.f32 %v395, 1.442695
    %v451 = vpow.pop %v450
    %v452 = vmul.f32 %v396, 1.442695
    %v453 = vpow.pop %v452
    %v454 = vmul.f32 %v397, 1.442695
    %v455 = vpow.pop %v454
    %v456 = vmul.f32 %v398, 1.442695
    %v457 = vpow.pop %v456
    %v458 = vmul.f32 %v399, 1.442695
    %v459 = vpow.pop %v458
    %v460 = vmul.f32 %v400, 1.442695
    %v461 = vpow.pop %v460
    %v462 = vmul.f32 %v401, 1.442695
    %v463 = vpow.pop %v462
    %v464 = vmul.f32 %v402, 1.442695
    %v465 = vpow.pop %v464
    %v466 = vmul.f32 %v403, 1.442695
    %v467 = vpow.pop %v466
    %468 = vst [vmem:[#allocation2] sm:$0xff] %v405
    %469 = vst [vmem:[#allocation2 + $0x8] sm:$0xff] %v407
    %470 = vst [vmem:[#allocation2 + $0x10] sm:$0xff] %v409
    %471 = vst [vmem:[#allocation2 + $0x18] sm:$0xff] %v411
    %472 = vst [vmem:[#allocation2 + $0x20] sm:$0xff] %v413
    %473 = vst [vmem:[#allocation2 + $0x28] sm:$0xff] %v415
    %474 = vst [vmem:[#allocation2 + $0x30] sm:$0xff] %v417
    %475 = vst [vmem:[#allocation2 + $0x38] sm:$0xff] %v419
    %476 = vst [vmem:[#allocation2 + $0x40] sm:$0xff] %v421
    %477 = vst [vmem:[#allocation2 + $0x48] sm:$0xff] %v423
    %478 = vst [vmem:[#allocation2 + $0x50] sm:$0xff] %v425
    %479 = vst [vmem:[#allocation2 + $0x58] sm:$0xff] %v427
    %480 = vst [vmem:[#allocation2 + $0x60] sm:$0xff] %v429
    %481 = vst [vmem:[#allocation2 + $0x68] sm:$0xff] %v431
    %482 = vst [vmem:[#allocation2 + $0x70] sm:$0xff] %v433
    %483 = vst [vmem:[#allocation2 + $0x78] sm:$0xff] %v435
    %484 = vst [vmem:[#allocation2 + $0x80] sm:$0xff] %v437
    %485 = vst [vmem:[#allocation2 + $0x88] sm:$0xff] %v439
    %486 = vst [vmem:[#allocation2 + $0x90] sm:$0xff] %v441
    %487 = vst [vmem:[#allocation2 + $0x98] sm:$0xff] %v443
    %488 = vst [vmem:[#allocation2 + $0xa0] sm:$0xff] %v445
    %489 = vst [vmem:[#allocation2 + $0xa8] sm:$0xff] %v447
    %490 = vst [vmem:[#allocation2 + $0xb0] sm:$0xff] %v449
    %491 = vst [vmem:[#allocation2 + $0xb8] sm:$0xff] %v451
    %492 = vst [vmem:[#allocation2 + $0xc0] sm:$0xff] %v453
    %493 = vst [vmem:[#allocation2 + $0xc8] sm:$0xff] %v455
    %494 = vst [vmem:[#allocation2 + $0xd0] sm:$0xff] %v457
    %495 = vst [vmem:[#allocation2 + $0xd8] sm:$0xff] %v459
    %496 = vst [vmem:[#allocation2 + $0xe0] sm:$0xff] %v461
    %497 = vst [vmem:[#allocation2 + $0xe8] sm:$0xff] %v463
    %498 = vst [vmem:[#allocation2 + $0xf0] sm:$0xff] %v465
    %499 = vst [vmem:[#allocation2 + $0xf8] sm:$0xff] %v467
    // Predicated region
    $region10: #{_rbf_pallas.1} parent=1 // pred_check
      _
    $region11: #{_rbf_pallas.1} parent=1 // pred_check_branch
      %501 = sbr.rel (0) target = $region13
    $region12: #{_rbf_pallas.1} parent=1 // pred_region
      %s503 = ssub.s32 4096, 4096
      %504 = vsyncadd [#allocation3], %s503
      %s505 = sshll.u32 [#allocation2], 4
      %s506 = int_to_ptr.vmem [resolvable:$true] %s505
      %511 = dma.vmem_to_hbm [thread:$0]  %s506, 4096, %s2, [#allocation3], 128, 128, 8
    $region13: #{_rbf_pallas.1} parent=1 // pred_fallthru
      _
    // Predicated region
    $region14: #{_rbf_pallas.1} parent=1 // pred_check
      _
    $region15: #{_rbf_pallas.1} parent=1 // pred_check_branch
      %513 = sbr.rel (0) target = $region17
    $region16: #{_rbf_pallas.1} parent=1 // pred_region
      %514 = dma.done [#allocation3], 4096
    $region17: #{_rbf_pallas.1} parent=1 // pred_fallthru
      _
    %515 = vsyncpa [#allocation3], 1

</llo_original>
